<compile_context>
chip_gen: v6e
topology: v6e:2x2x1
jax: 0.10.0
libtpu: 0.0.40
codegen_flags: <defaults>
</compile_context>

<pallas_src>
import jax
import jax.numpy as jnp
from jax.experimental import pallas as pl
from jax.experimental.pallas import tpu as pltpu


def _cdiv(a, b):
    return -(-a // b)


def _round_up(v, m):
    return _cdiv(v, m) * m


def two_layer_fc_kernel(x_ref, w1_ref, b1_ref, w2_ref, b2_ref, out_ref):
    # x_ref:   [TB, D_in]   f32  -> cast to bf16 per-tile (hides under DMA slack)
    # w1_ref:  [D_in, H]    bf16 (canonical [K, N] layout)
    # b1_ref:  [1, H]       f32
    # w2_ref:  [H, Cp]      bf16 (class dim zero-padded to a lane multiple)
    # b2_ref:  [1, Cp]      f32
    # out_ref: [TB, Cp]     f32
    x_bf = x_ref[...].astype(jnp.bfloat16)
    h = jnp.dot(x_bf, w1_ref[...], preferred_element_type=jnp.float32)
    h = jnp.maximum(h + b1_ref[...], 0.0)            # f32 epilogue (bias + ReLU)
    s = jnp.dot(h.astype(jnp.bfloat16), w2_ref[...],
                preferred_element_type=jnp.float32)
    out_ref[...] = (s + b2_ref[...]).astype(out_ref.dtype)


def prepare_params(w1, b1, w2, b2):
    """One-time (init-time) weight prep: cast + transpose + class-pad, fused.
    w1: [hidden, d_in], w2: [num_classes, hidden] (torch nn.Linear layout)."""
    hidden, d_in = w1.shape
    num_classes = w2.shape[0]
    c_pad = max(128, _round_up(num_classes, 128))     # lane-dense output stores
    w1_t = w1.T.astype(jnp.bfloat16)                                       # [d_in, H]
    w2_t = (jnp.zeros((hidden, c_pad), jnp.bfloat16)
            .at[:, :num_classes].set(w2.T.astype(jnp.bfloat16)))           # [H, Cp]
    b1_2d = b1.reshape(1, hidden).astype(jnp.float32)                      # [1, H]
    b2_2d = (jnp.zeros((1, c_pad), jnp.float32)
             .at[0, :num_classes].set(b2.astype(jnp.float32)))             # [1, Cp]
    return (w1_t, b1_2d, w2_t, b2_2d), num_classes


def _vmem_limit_bytes():
    # Per-generation VMEM budget with headroom (v7x: ~48 MiB, v5e/v6e: ~96 MiB).
    try:
        cap = pltpu.get_tpu_info().vmem_capacity_bytes
    except Exception:
        cap = 64 << 20
    return int(cap * 3 // 4)


def two_layer_fc(x, params, num_classes, *, block_b=512):
    """x: [B, C, H, W] float32; params from prepare_params().
    Returns scores [B, num_classes] float32 (matches torch forward)."""
    w1_t, b1_2d, w2_t, b2_2d = params
    d_in, hidden = w1_t.shape
    c_pad = w2_t.shape[1]
    B = x.shape[0]
    x_flat = x.reshape(B, -1).astype(jnp.float32)     # matches torch x.view(B, -1)
    assert x_flat.shape[1] == d_in

    if B <= 128:
        # Tiny batch: single no-grid invocation, every operand one full VMEM block.
        out = pl.pallas_call(
            two_layer_fc_kernel,
            out_shape=jax.ShapeDtypeStruct((B, c_pad), jnp.float32),
            in_specs=[
                pl.BlockSpec((B, d_in), lambda: (0, 0)),
                pl.BlockSpec((d_in, hidden), lambda: (0, 0)),
                pl.BlockSpec((1, hidden), lambda: (0, 0)),
                pl.BlockSpec((hidden, c_pad), lambda: (0, 0)),
                pl.BlockSpec((1, c_pad), lambda: (0, 0)),
            ],
            out_specs=pl.BlockSpec((B, c_pad), lambda: (0, 0)),
        )(x_flat, w1_t, b1_2d, w2_t, b2_2d)
    else:
        # Large batch: tile rows (no padded x copy; Pallas masks the ragged tail).
        # Force >= 2 grid steps so v7x's 2 TensorCores both get work.
        tb = min(block_b, _round_up(_cdiv(B, 2), 8))
        grid_b = _cdiv(B, tb)
        flops = 2 * B * (d_in * hidden + hidden * c_pad)
        bytes_accessed = (x_flat.size * 4 + w1_t.size * 2 + w2_t.size * 2
                          + b1_2d.size * 4 + b2_2d.size * 4 + B * c_pad * 4)
        out = pl.pallas_call(
            two_layer_fc_kernel,
            out_shape=jax.ShapeDtypeStruct((B, c_pad), jnp.float32),
            grid=(grid_b,),
            in_specs=[
                pl.BlockSpec((tb, d_in), lambda i: (i, 0)),
                # Weights/biases map to block (0,0) every step -> stay resident.
                pl.BlockSpec((d_in, hidden), lambda i: (0, 0)),
                pl.BlockSpec((1, hidden), lambda i: (0, 0)),
                pl.BlockSpec((hidden, c_pad), lambda i: (0, 0)),
                pl.BlockSpec((1, c_pad), lambda i: (0, 0)),
            ],
            out_specs=pl.BlockSpec((tb, c_pad), lambda i: (i, 0)),
            compiler_params=pltpu.CompilerParams(
                dimension_semantics=("parallel",),
                vmem_limit_bytes=_vmem_limit_bytes(),
            ),
            cost_estimate=pl.CostEstimate(
                flops=flops, transcendentals=0, bytes_accessed=bytes_accessed),
        )(x_flat, w1_t, b1_2d, w2_t, b2_2d)

    # Padded class columns are exact zeros (w2/b2 zero-padded); single slice.
    return out[:, :num_classes]


def init_params(key, input_size, hidden_size, num_classes):
    """Deterministic init mirroring TwoLayerFC.__init__:
       kaiming_normal_ weights (std = sqrt(2/fan_in)), default uniform biases."""
    k1, k2, k3, k4 = jax.random.split(key, 4)
    w1 = jax.random.normal(k1, (hidden_size, input_size), jnp.float32) * jnp.sqrt(
        2.0 / input_size)
    b1 = jax.random.uniform(
        k2, (hidden_size,), jnp.float32,
        minval=-1.0 / jnp.sqrt(input_size), maxval=1.0 / jnp.sqrt(input_size))
    w2 = jax.random.normal(k3, (num_classes, hidden_size), jnp.float32) * jnp.sqrt(
        2.0 / hidden_size)
    b2 = jax.random.uniform(
        k4, (num_classes,), jnp.float32,
        minval=-1.0 / jnp.sqrt(hidden_size), maxval=1.0 / jnp.sqrt(hidden_size))
    return w1, b1, w2, b2


if __name__ == "__main__":
    key = jax.random.PRNGKey(0)
    kx, kp = jax.random.split(key)

    # Small shapes consistent with the module's forward: NCHW input, flattened.
    B, C, H, W = 2, 4, 16, 16
    input_size = C * H * W          # 1024
    hidden_size = 32
    num_classes = 10

    x = jax.random.normal(kx, (B, C, H, W), jnp.float32)
    w1, b1, w2, b2 = init_params(kp, input_size, hidden_size, num_classes)

    # Weight transforms hoisted to "init time" (done once, not per forward call).
    params, nc = prepare_params(w1, b1, w2, b2)

    scores = two_layer_fc(x, params, nc)
    jax.block_until_ready(scores)
    assert scores.shape == (B, num_classes)

    # Reference matching the kernel's bf16-operand / f32-accumulate precision.
    x_flat = x.reshape(B, -1)
    h_ref = jnp.maximum(
        jnp.dot(x_flat.astype(jnp.bfloat16), w1.astype(jnp.bfloat16).T,
                preferred_element_type=jnp.float32) + b1, 0.0)
    ref_bf16 = jnp.dot(h_ref.astype(jnp.bfloat16), w2.astype(jnp.bfloat16).T,
                       preferred_element_type=jnp.float32) + b2
    assert jnp.allclose(scores, ref_bf16, atol=1e-2, rtol=1e-2)

    # Full-f32 reference (loose tolerance: kernel intentionally uses bf16 MXU inputs).
    ref_f32 = jnp.maximum(x_flat @ w1.T + b1, 0.0) @ w2.T + b2
    assert jnp.allclose(scores, ref_f32, atol=5e-2, rtol=5e-2)

    print("KERNEL_OK")
</pallas_src>

<mosaic_0001>
module attributes {stable_mosaic.version = 11 : i64} {
  func.func @two_layer_fc_kernel(%arg0: memref<2x1024xf32, #tpu.memory_space<vmem>>, %arg1: memref<1024x32xbf16, #tpu.memory_space<vmem>>, %arg2: memref<1x32xf32, #tpu.memory_space<vmem>>, %arg3: memref<32x128xbf16, #tpu.memory_space<vmem>>, %arg4: memref<1x128xf32, #tpu.memory_space<vmem>>, %arg5: memref<2x128xf32, #tpu.memory_space<vmem>>) attributes {dimension_semantics = [], scalar_prefetch = 0 : i64, scratch_operands = 0 : i64, tpu.core_type = #tpu.core_type<tc>} {
    %c0 = arith.constant 0 : index
    %c0_0 = arith.constant 0 : index
    %0 = vector.load %arg0[%c0, %c0_0] : memref<2x1024xf32, #tpu.memory_space<vmem>>, vector<2x1024xf32>
    %1 = arith.truncf %0 : vector<2x1024xf32> to vector<2x1024xbf16>
    %c0_1 = arith.constant 0 : index
    %c0_2 = arith.constant 0 : index
    %2 = vector.load %arg1[%c0_1, %c0_2] : memref<1024x32xbf16, #tpu.memory_space<vmem>>, vector<1024x32xbf16>
    %cst = arith.constant dense<0.000000e+00> : vector<2x32xf32>
    %3 = tpu.matmul %1, %2, %cst {dimension_numbers = #tpu.dot_dimension_numbers<[1], [0], [0], [1], [0, 0, 1, 1], [], []>} : vector<2x1024xbf16>, vector<1024x32xbf16>, vector<2x32xf32> -> vector<2x32xf32>
    %c0_3 = arith.constant 0 : index
    %c0_4 = arith.constant 0 : index
    %4 = vector.load %arg2[%c0_3, %c0_4] : memref<1x32xf32, #tpu.memory_space<vmem>>, vector<1x32xf32>
    %5 = vector.broadcast %4 : vector<1x32xf32> to vector<2x32xf32>
    %6 = arith.addf %3, %5 : vector<2x32xf32>
    %cst_5 = arith.constant 0.000000e+00 : f32
    %7 = vector.broadcast %cst_5 : f32 to vector<2x32xf32>
    %8 = arith.maximumf %6, %7 : vector<2x32xf32>
    %9 = arith.truncf %8 : vector<2x32xf32> to vector<2x32xbf16>
    %c0_6 = arith.constant 0 : index
    %c0_7 = arith.constant 0 : index
    %10 = vector.load %arg3[%c0_6, %c0_7] : memref<32x128xbf16, #tpu.memory_space<vmem>>, vector<32x128xbf16>
    %cst_8 = arith.constant dense<0.000000e+00> : vector<2x128xf32>
    %11 = tpu.matmul %9, %10, %cst_8 {dimension_numbers = #tpu.dot_dimension_numbers<[1], [0], [0], [1], [0, 0, 1, 1], [], []>} : vector<2x32xbf16>, vector<32x128xbf16>, vector<2x128xf32> -> vector<2x128xf32>
    %c0_9 = arith.constant 0 : index
    %c0_10 = arith.constant 0 : index
    %12 = vector.load %arg4[%c0_9, %c0_10] : memref<1x128xf32, #tpu.memory_space<vmem>>, vector<1x128xf32>
    %13 = vector.broadcast %12 : vector<1x128xf32> to vector<2x128xf32>
    %14 = arith.addf %11, %13 : vector<2x128xf32>
    %c0_11 = arith.constant 0 : index
    %c0_12 = arith.constant 0 : index
    %15 = vector.load %arg5[%c0_11, %c0_12] : memref<2x128xf32, #tpu.memory_space<vmem>>, vector<2x128xf32>
    tpu.vector_store %arg5[%c0_11, %c0_12], %14 {strides = array<i32>} : memref<2x128xf32, #tpu.memory_space<vmem>>, vector<2x128xf32>,
    return
  }
}

</mosaic_0001>

<llo_original>
// kernel: tpu_custom_call.1
$region0: #{tpu_custom_call.1}
  #allocation0 [shape = 'u32[]', space=smem, size = 0x4, offset = 0x4, fixed_abs, tag = 'smem constant byte address 0x4 - core index']
  #allocation1 [shape = 'u32[144,128]{1,0:T(1,128)}', space=vmem, size = 0x12000, scoped, tag = 'internal scratch']
  %s0 = inlined_call_operand.vmem [shape: f32[2,1024], index: 0, kind: input, shape index: {}]
  %s1 = inlined_call_operand.vmem [shape: bf16[1024,32], index: 1, kind: input, shape index: {}]
  %s2 = inlined_call_operand.vmem [shape: f32[1,32], index: 2, kind: input, shape index: {}]
  %s3 = inlined_call_operand.vmem [shape: bf16[32,128], index: 3, kind: input, shape index: {}]
  %s4 = inlined_call_operand.vmem [shape: f32[1,128], index: 4, kind: input, shape index: {}]
  %s5 = inlined_call_operand.hbm [shape: f32[2,128], index: 5, kind: output, shape index: {}]
  %s6 = sld [smem:[#allocation0]]
  $region30: #{tpu_custom_call.1} parent=0
    _
  %s8 = ssub.s32 1, %s6
  %s9 = scalar_select 0, %s8, %s6
  $region1: #{tpu_custom_call.1} parent=0
    #allocation2 [shape = 'u8[1024]{0}', space=vmem, size = 0x400, scoped, tag = 'output window, operand 0, single buffered']
    #allocation3 [shape = 's32[1]{0}', space=sflag, size = 0x4, scoped, tag = 'scoped memory for tpu_custom_call.1']
    %10 = vsyncpa [#allocation3], 0
    // Predicated region
    $region2: #{tpu_custom_call.1} parent=1 // pred_check
      _
    $region3: #{tpu_custom_call.1} parent=1 // pred_check_branch
      %12 = sbr.rel (0) target = $region5
    $region4: #{tpu_custom_call.1} parent=1 // pred_region
      _
    $region5: #{tpu_custom_call.1} parent=1 // pred_fallthru
      _
    // Predicated region
    $region6: #{tpu_custom_call.1} parent=1 // pred_check
      _
    $region7: #{tpu_custom_call.1} parent=1 // pred_check_branch
      %14 = sbr.rel (0) target = $region9
    $region8: #{tpu_custom_call.1} parent=1 // pred_region
      _
    $region9: #{tpu_custom_call.1} parent=1 // pred_fallthru
      _
    // Predicated region
    $region10: #{tpu_custom_call.1} parent=1 // pred_check
      _
    $region11: #{tpu_custom_call.1} parent=1 // pred_check_branch
      %16 = sbr.rel (0) target = $region13
    $region12: #{tpu_custom_call.1} parent=1 // pred_region
      _
    $region13: #{tpu_custom_call.1} parent=1 // pred_fallthru
      _
    // Predicated region
    $region14: #{tpu_custom_call.1} parent=1 // pred_check
      _
    $region15: #{tpu_custom_call.1} parent=1 // pred_check_branch
      %18 = sbr.rel (0) target = $region17
    $region16: #{tpu_custom_call.1} parent=1 // pred_region
      _
    $region17: #{tpu_custom_call.1} parent=1 // pred_fallthru
      _
    // Predicated region
    $region18: #{tpu_custom_call.1} parent=1 // pred_check
      _
    $region19: #{tpu_custom_call.1} parent=1 // pred_check_branch
      %20 = sbr.rel (0) target = $region21
    $region20: #{tpu_custom_call.1} parent=1 // pred_region
      _
    $region21: #{tpu_custom_call.1} parent=1 // pred_fallthru
      _
    %v22 = vld [vmem:[%s0] sm:$0xff]
    %v23 = vld [vmem:[%s0 + $0x8] sm:$0xff]
    %v26 = vcombine.high %v22, %v22
    %v28 = vunpack.c.l.s4 1983009808
    %v29 = vunpack.c.0.s8 %v28
    %v30 = vlaneseq
    %v31 = vshrl.u32 %v30, 7
    %v32 = vsub.s32 %v29, %v31
    %v33 = vrot.slane %v22, %v32
    %v35 = vunpack.c.l.s4 1983009808
    %v36 = vunpack.c.0.s8 %v35
    %v37 = vlaneseq
    %v38 = vshrl.u32 %v37, 7
    %v39 = vsub.s32 %v36, %v38
    %v40 = vrot.slane %v26, %v39
    %v41 = vcombine.high %v33, %v33
    %v42 = vcombine.high %v40, %v40
    %v43 = vcombine.high %v23, %v23
    %v45 = vunpack.c.l.s4 1983009808
    %v46 = vunpack.c.0.s8 %v45
    %v47 = vlaneseq
    %v48 = vshrl.u32 %v47, 7
    %v49 = vsub.s32 %v46, %v48
    %v50 = vrot.slane %v23, %v49
    %v52 = vunpack.c.l.s4 1983009808
    %v53 = vunpack.c.0.s8 %v52
    %v54 = vlaneseq
    %v55 = vshrl.u32 %v54, 7
    %v56 = vsub.s32 %v53, %v55
    %v57 = vrot.slane %v43, %v56
    %v58 = vcombine.high %v50, %v50
    %v59 = vcombine.high %v57, %v57
    %v68 = vpack.c.bf16 %v33, %v33
    %v69 = vpack.c.bf16 %v41, %v41
    %v70 = vpack.c.bf16 %v40, %v40
    %v71 = vpack.c.bf16 %v42, %v42
    %v72 = vpack.c.bf16 %v50, %v50
    %v73 = vpack.c.bf16 %v58, %v58
    %v74 = vpack.c.bf16 %v57, %v57
    %v75 = vpack.c.bf16 %v59, %v59
    %v76 = vld [vmem:[%s1] sm:$0xf]
    %v77 = vld [vmem:[%s1 + $0x4] sm:$0xf]
    %v78 = vld [vmem:[%s1 + $0x8] sm:$0xf]
    %v79 = vld [vmem:[%s1 + $0xc] sm:$0xf]
    %v80 = vld [vmem:[%s1 + $0x10] sm:$0xf]
    %v81 = vld [vmem:[%s1 + $0x14] sm:$0xf]
    %v82 = vld [vmem:[%s1 + $0x18] sm:$0xf]
    %v83 = vld [vmem:[%s1 + $0x1c] sm:$0xf]
    %v84 = vld [vmem:[%s1 + $0x20] sm:$0xf]
    %v85 = vld [vmem:[%s1 + $0x24] sm:$0xf]
    %v86 = vld [vmem:[%s1 + $0x28] sm:$0xf]
    %v87 = vld [vmem:[%s1 + $0x2c] sm:$0xf]
    %v88 = vld [vmem:[%s1 + $0x30] sm:$0xf]
    %v89 = vld [vmem:[%s1 + $0x34] sm:$0xf]
    %v90 = vld [vmem:[%s1 + $0x38] sm:$0xf]
    %v91 = vld [vmem:[%s1 + $0x3c] sm:$0xf]
    %v92 = vld [vmem:[%s1 + $0x40] sm:$0xf]
    %v93 = vld [vmem:[%s1 + $0x44] sm:$0xf]
    %v94 = vld [vmem:[%s1 + $0x48] sm:$0xf]
    %v95 = vld [vmem:[%s1 + $0x4c] sm:$0xf]
    %v96 = vld [vmem:[%s1 + $0x50] sm:$0xf]
    %v97 = vld [vmem:[%s1 + $0x54] sm:$0xf]
    %v98 = vld [vmem:[%s1 + $0x58] sm:$0xf]
    %v99 = vld [vmem:[%s1 + $0x5c] sm:$0xf]
    %v100 = vld [vmem:[%s1 + $0x60] sm:$0xf]
    %v101 = vld [vmem:[%s1 + $0x64] sm:$0xf]
    %v102 = vld [vmem:[%s1 + $0x68] sm:$0xf]
    %v103 = vld [vmem:[%s1 + $0x6c] sm:$0xf]
    %v104 = vld [vmem:[%s1 + $0x70] sm:$0xf]
    %v105 = vld [vmem:[%s1 + $0x74] sm:$0xf]
    %v106 = vld [vmem:[%s1 + $0x78] sm:$0xf]
    %v107 = vld [vmem:[%s1 + $0x7c] sm:$0xf]
    %v108 = vld [vmem:[%s1 + $0x80] sm:$0xf]
    %v109 = vld [vmem:[%s1 + $0x84] sm:$0xf]
    %v110 = vld [vmem:[%s1 + $0x88] sm:$0xf]
    %v111 = vld [vmem:[%s1 + $0x8c] sm:$0xf]
    %v112 = vld [vmem:[%s1 + $0x90] sm:$0xf]
    %v113 = vld [vmem:[%s1 + $0x94] sm:$0xf]
    %v114 = vld [vmem:[%s1 + $0x98] sm:$0xf]
    %v115 = vld [vmem:[%s1 + $0x9c] sm:$0xf]
    %v116 = vld [vmem:[%s1 + $0xa0] sm:$0xf]
    %v117 = vld [vmem:[%s1 + $0xa4] sm:$0xf]
    %v118 = vld [vmem:[%s1 + $0xa8] sm:$0xf]
    %v119 = vld [vmem:[%s1 + $0xac] sm:$0xf]
    %v120 = vld [vmem:[%s1 + $0xb0] sm:$0xf]
    %v121 = vld [vmem:[%s1 + $0xb4] sm:$0xf]
    %v122 = vld [vmem:[%s1 + $0xb8] sm:$0xf]
    %v123 = vld [vmem:[%s1 + $0xbc] sm:$0xf]
    %v124 = vld [vmem:[%s1 + $0xc0] sm:$0xf]
    %v125 = vld [vmem:[%s1 + $0xc4] sm:$0xf]
    %v126 = vld [vmem:[%s1 + $0xc8] sm:$0xf]
    %v127 = vld [vmem:[%s1 + $0xcc] sm:$0xf]
    %v128 = vld [vmem:[%s1 + $0xd0] sm:$0xf]
    %v129 = vld [vmem:[%s1 + $0xd4] sm:$0xf]
    %v130 = vld [vmem:[%s1 + $0xd8] sm:$0xf]
    %v131 = vld [vmem:[%s1 + $0xdc] sm:$0xf]
    %v132 = vld [vmem:[%s1 + $0xe0] sm:$0xf]
    %v133 = vld [vmem:[%s1 + $0xe4] sm:$0xf]
    %v134 = vld [vmem:[%s1 + $0xe8] sm:$0xf]
    %v135 = vld [vmem:[%s1 + $0xec] sm:$0xf]
    %v136 = vld [vmem:[%s1 + $0xf0] sm:$0xf]
    %v137 = vld [vmem:[%s1 + $0xf4] sm:$0xf]
    %v138 = vld [vmem:[%s1 + $0xf8] sm:$0xf]
    %v139 = vld [vmem:[%s1 + $0xfc] sm:$0xf]
    %v140 = vld [vmem:[%s1 + $0x100] sm:$0xf]
    %v141 = vld [vmem:[%s1 + $0x104] sm:$0xf]
    %v142 = vld [vmem:[%s1 + $0x108] sm:$0xf]
    %v143 = vld [vmem:[%s1 + $0x10c] sm:$0xf]
    %v144 = vld [vmem:[%s1 + $0x110] sm:$0xf]
    %v145 = vld [vmem:[%s1 + $0x114] sm:$0xf]
    %v146 = vld [vmem:[%s1 + $0x118] sm:$0xf]
    %v147 = vld [vmem:[%s1 + $0x11c] sm:$0xf]
    %v148 = vld [vmem:[%s1 + $0x120] sm:$0xf]
    %v149 = vld [vmem:[%s1 + $0x124] sm:$0xf]
    %v150 = vld [vmem:[%s1 + $0x128] sm:$0xf]
    %v151 = vld [vmem:[%s1 + $0x12c] sm:$0xf]
    %v152 = vld [vmem:[%s1 + $0x130] sm:$0xf]
    %v153 = vld [vmem:[%s1 + $0x134] sm:$0xf]
    %v154 = vld [vmem:[%s1 + $0x138] sm:$0xf]
    %v155 = vld [vmem:[%s1 + $0x13c] sm:$0xf]
    %v156 = vld [vmem:[%s1 + $0x140] sm:$0xf]
    %v157 = vld [vmem:[%s1 + $0x144] sm:$0xf]
    %v158 = vld [vmem:[%s1 + $0x148] sm:$0xf]
    %v159 = vld [vmem:[%s1 + $0x14c] sm:$0xf]
    %v160 = vld [vmem:[%s1 + $0x150] sm:$0xf]
    %v161 = vld [vmem:[%s1 + $0x154] sm:$0xf]
    %v162 = vld [vmem:[%s1 + $0x158] sm:$0xf]
    %v163 = vld [vmem:[%s1 + $0x15c] sm:$0xf]
    %v164 = vld [vmem:[%s1 + $0x160] sm:$0xf]
    %v165 = vld [vmem:[%s1 + $0x164] sm:$0xf]
    %v166 = vld [vmem:[%s1 + $0x168] sm:$0xf]
    %v167 = vld [vmem:[%s1 + $0x16c] sm:$0xf]
    %v168 = vld [vmem:[%s1 + $0x170] sm:$0xf]
    %v169 = vld [vmem:[%s1 + $0x174] sm:$0xf]
    %v170 = vld [vmem:[%s1 + $0x178] sm:$0xf]
    %v171 = vld [vmem:[%s1 + $0x17c] sm:$0xf]
    %v172 = vld [vmem:[%s1 + $0x180] sm:$0xf]
    %v173 = vld [vmem:[%s1 + $0x184] sm:$0xf]
    %v174 = vld [vmem:[%s1 + $0x188] sm:$0xf]
    %v175 = vld [vmem:[%s1 + $0x18c] sm:$0xf]
    %v176 = vld [vmem:[%s1 + $0x190] sm:$0xf]
    %v177 = vld [vmem:[%s1 + $0x194] sm:$0xf]
    %v178 = vld [vmem:[%s1 + $0x198] sm:$0xf]
    %v179 = vld [vmem:[%s1 + $0x19c] sm:$0xf]
    %v180 = vld [vmem:[%s1 + $0x1a0] sm:$0xf]
    %v181 = vld [vmem:[%s1 + $0x1a4] sm:$0xf]
    %v182 = vld [vmem:[%s1 + $0x1a8] sm:$0xf]
    %v183 = vld [vmem:[%s1 + $0x1ac] sm:$0xf]
    %v184 = vld [vmem:[%s1 + $0x1b0] sm:$0xf]
    %v185 = vld [vmem:[%s1 + $0x1b4] sm:$0xf]
    %v186 = vld [vmem:[%s1 + $0x1b8] sm:$0xf]
    %v187 = vld [vmem:[%s1 + $0x1bc] sm:$0xf]
    %v188 = vld [vmem:[%s1 + $0x1c0] sm:$0xf]
    %v189 = vld [vmem:[%s1 + $0x1c4] sm:$0xf]
    %v190 = vld [vmem:[%s1 + $0x1c8] sm:$0xf]
    %v191 = vld [vmem:[%s1 + $0x1cc] sm:$0xf]
    %v192 = vld [vmem:[%s1 + $0x1d0] sm:$0xf]
    %v193 = vld [vmem:[%s1 + $0x1d4] sm:$0xf]
    %v194 = vld [vmem:[%s1 + $0x1d8] sm:$0xf]
    %v195 = vld [vmem:[%s1 + $0x1dc] sm:$0xf]
    %v196 = vld [vmem:[%s1 + $0x1e0] sm:$0xf]
    %v197 = vld [vmem:[%s1 + $0x1e4] sm:$0xf]
    %v198 = vld [vmem:[%s1 + $0x1e8] sm:$0xf]
    %v199 = vld [vmem:[%s1 + $0x1ec] sm:$0xf]
    %v200 = vld [vmem:[%s1 + $0x1f0] sm:$0xf]
    %v201 = vld [vmem:[%s1 + $0x1f4] sm:$0xf]
    %v202 = vld [vmem:[%s1 + $0x1f8] sm:$0xf]
    %v203 = vld [vmem:[%s1 + $0x1fc] sm:$0xf]
    %v204 = vld [vmem:[%s2] sm:$0x1]
    %v206 = vlaneseq
    %v207 = vshrl.u32 %v206, 7
    %v208 = vsub.s32 0, %v207
    %v209 = vrot.slane %v204, %v208
    %v339 = vunpack.c.l.b16 %v76
    %v340 = vunpack.c.l.b16 %v77
    %v341 = vunpack.c.l.b16 %v78
    %v342 = vunpack.c.l.b16 %v79
    %v343 = vunpack.c.l.b16 %v80
    %v344 = vunpack.c.l.b16 %v81
    %v345 = vunpack.c.l.b16 %v82
    %v346 = vunpack.c.l.b16 %v83
    %v347 = vunpack.c.l.b16 %v84
    %v348 = vunpack.c.l.b16 %v85
    %v349 = vunpack.c.l.b16 %v86
    %v350 = vunpack.c.l.b16 %v87
    %v351 = vunpack.c.l.b16 %v88
    %v352 = vunpack.c.l.b16 %v89
    %v353 = vunpack.c.l.b16 %v90
    %v354 = vunpack.c.l.b16 %v91
    %v355 = vunpack.c.l.b16 %v92
    %v356 = vunpack.c.l.b16 %v93
    %v357 = vunpack.c.l.b16 %v94
    %v358 = vunpack.c.l.b16 %v95
    %v359 = vunpack.c.l.b16 %v96
    %v360 = vunpack.c.l.b16 %v97
    %v361 = vunpack.c.l.b16 %v98
    %v362 = vunpack.c.l.b16 %v99
    %v363 = vunpack.c.l.b16 %v100
    %v364 = vunpack.c.l.b16 %v101
    %v365 = vunpack.c.l.b16 %v102
    %v366 = vunpack.c.l.b16 %v103
    %v367 = vunpack.c.l.b16 %v104
    %v368 = vunpack.c.l.b16 %v105
    %v369 = vunpack.c.l.b16 %v106
    %v370 = vunpack.c.l.b16 %v107
    %v371 = vunpack.c.l.b16 %v108
    %v372 = vunpack.c.l.b16 %v109
    %v373 = vunpack.c.l.b16 %v110
    %v374 = vunpack.c.l.b16 %v111
    %v375 = vunpack.c.l.b16 %v112
    %v376 = vunpack.c.l.b16 %v113
    %v377 = vunpack.c.l.b16 %v114
    %v378 = vunpack.c.l.b16 %v115
    %v379 = vunpack.c.l.b16 %v116
    %v380 = vunpack.c.l.b16 %v117
    %v381 = vunpack.c.l.b16 %v118
    %v382 = vunpack.c.l.b16 %v119
    %v383 = vunpack.c.l.b16 %v120
    %v384 = vunpack.c.l.b16 %v121
    %v385 = vunpack.c.l.b16 %v122
    %v386 = vunpack.c.l.b16 %v123
    %v387 = vunpack.c.l.b16 %v124
    %v388 = vunpack.c.l.b16 %v125
    %v389 = vunpack.c.l.b16 %v126
    %v390 = vunpack.c.l.b16 %v127
    %v391 = vunpack.c.l.b16 %v128
    %v392 = vunpack.c.l.b16 %v129
    %v393 = vunpack.c.l.b16 %v130
    %v394 = vunpack.c.l.b16 %v131
    %v395 = vunpack.c.l.b16 %v132
    %v396 = vunpack.c.l.b16 %v133
    %v397 = vunpack.c.l.b16 %v134
    %v398 = vunpack.c.l.b16 %v135
    %v399 = vunpack.c.l.b16 %v136
    %v400 = vunpack.c.l.b16 %v137
    %v401 = vunpack.c.l.b16 %v138
    %v402 = vunpack.c.l.b16 %v139
    %v403 = vunpack.c.l.b16 %v140
    %v404 = vunpack.c.l.b16 %v141
    %v405 = vunpack.c.l.b16 %v142
    %v406 = vunpack.c.l.b16 %v143
    %v407 = vunpack.c.l.b16 %v144
    %v408 = vunpack.c.l.b16 %v145
    %v409 = vunpack.c.l.b16 %v146
    %v410 = vunpack.c.l.b16 %v147
    %v411 = vunpack.c.l.b16 %v148
    %v412 = vunpack.c.l.b16 %v149
    %v413 = vunpack.c.l.b16 %v150
    %v414 = vunpack.c.l.b16 %v151
    %v415 = vunpack.c.l.b16 %v152
    %v416 = vunpack.c.l.b16 %v153
    %v417 = vunpack.c.l.b16 %v154
    %v418 = vunpack.c.l.b16 %v155
    %v419 = vunpack.c.l.b16 %v156
    %v420 = vunpack.c.l.b16 %v157
    %v421 = vunpack.c.l.b16 %v158
    %v422 = vunpack.c.l.b16 %v159
    %v423 = vunpack.c.l.b16 %v160
    %v424 = vunpack.c.l.b16 %v161
    %v425 = vunpack.c.l.b16 %v162
    %v426 = vunpack.c.l.b16 %v163
    %v427 = vunpack.c.l.b16 %v164
    %v428 = vunpack.c.l.b16 %v165
    %v429 = vunpack.c.l.b16 %v166
    %v430 = vunpack.c.l.b16 %v167
    %v431 = vunpack.c.l.b16 %v168
    %v432 = vunpack.c.l.b16 %v169
    %v433 = vunpack.c.l.b16 %v170
    %v434 = vunpack.c.l.b16 %v171
    %v435 = vunpack.c.l.b16 %v172
    %v436 = vunpack.c.l.b16 %v173
    %v437 = vunpack.c.l.b16 %v174
    %v438 = vunpack.c.l.b16 %v175
    %v439 = vunpack.c.l.b16 %v176
    %v440 = vunpack.c.l.b16 %v177
    %v441 = vunpack.c.l.b16 %v178
    %v442 = vunpack.c.l.b16 %v179
    %v443 = vunpack.c.l.b16 %v180
    %v444 = vunpack.c.l.b16 %v181
    %v445 = vunpack.c.l.b16 %v182
    %v446 = vunpack.c.l.b16 %v183
    %v447 = vunpack.c.l.b16 %v184
    %v448 = vunpack.c.l.b16 %v185
    %v449 = vunpack.c.l.b16 %v186
    %v450 = vunpack.c.l.b16 %v187
    %v451 = vunpack.c.l.b16 %v188
    %v452 = vunpack.c.l.b16 %v189
    %v453 = vunpack.c.l.b16 %v190
    %v454 = vunpack.c.l.b16 %v191
    %v455 = vunpack.c.l.b16 %v192
    %v456 = vunpack.c.l.b16 %v193
    %v457 = vunpack.c.l.b16 %v194
    %v458 = vunpack.c.l.b16 %v195
    %v459 = vunpack.c.l.b16 %v196
    %v460 = vunpack.c.l.b16 %v197
    %v461 = vunpack.c.l.b16 %v198
    %v462 = vunpack.c.l.b16 %v199
    %v463 = vunpack.c.l.b16 %v200
    %v464 = vunpack.c.l.b16 %v201
    %v465 = vunpack.c.l.b16 %v202
    %v466 = vunpack.c.l.b16 %v203
    %v467 = vpack.c.b16 %v340, %v339
    %v468 = vpack.c.b16 %v342, %v341
    %v469 = vpack.c.b16 %v344, %v343
    %v470 = vpack.c.b16 %v346, %v345
    %v471 = vpack.c.b16 %v348, %v347
    %v472 = vpack.c.b16 %v350, %v349
    %v473 = vpack.c.b16 %v352, %v351
    %v474 = vpack.c.b16 %v354, %v353
    %v475 = vpack.c.b16 %v356, %v355
    %v476 = vpack.c.b16 %v358, %v357
    %v477 = vpack.c.b16 %v360, %v359
    %v478 = vpack.c.b16 %v362, %v361
    %v479 = vpack.c.b16 %v364, %v363
    %v480 = vpack.c.b16 %v366, %v365
    %v481 = vpack.c.b16 %v368, %v367
    %v482 = vpack.c.b16 %v370, %v369
    %v483 = vpack.c.b16 %v372, %v371
    %v484 = vpack.c.b16 %v374, %v373
    %v485 = vpack.c.b16 %v376, %v375
    %v486 = vpack.c.b16 %v378, %v377
    %v487 = vpack.c.b16 %v380, %v379
    %v488 = vpack.c.b16 %v382, %v381
    %v489 = vpack.c.b16 %v384, %v383
    %v490 = vpack.c.b16 %v386, %v385
    %v491 = vpack.c.b16 %v388, %v387
    %v492 = vpack.c.b16 %v390, %v389
    %v493 = vpack.c.b16 %v392, %v391
    %v494 = vpack.c.b16 %v394, %v393
    %v495 = vpack.c.b16 %v396, %v395
    %v496 = vpack.c.b16 %v398, %v397
    %v497 = vpack.c.b16 %v400, %v399
    %v498 = vpack.c.b16 %v402, %v401
    %v499 = vpack.c.b16 %v404, %v403
    %v500 = vpack.c.b16 %v406, %v405
    %v501 = vpack.c.b16 %v408, %v407
    %v502 = vpack.c.b16 %v410, %v409
    %v503 = vpack.c.b16 %v412, %v411
    %v504 = vpack.c.b16 %v414, %v413
    %v505 = vpack.c.b16 %v416, %v415
    %v506 = vpack.c.b16 %v418, %v417
    %v507 = vpack.c.b16 %v420, %v419
    %v508 = vpack.c.b16 %v422, %v421
    %v509 = vpack.c.b16 %v424, %v423
    %v510 = vpack.c.b16 %v426, %v425
    %v511 = vpack.c.b16 %v428, %v427
    %v512 = vpack.c.b16 %v430, %v429
    %v513 = vpack.c.b16 %v432, %v431
    %v514 = vpack.c.b16 %v434, %v433
    %v515 = vpack.c.b16 %v436, %v435
    %v516 = vpack.c.b16 %v438, %v437
    %v517 = vpack.c.b16 %v440, %v439
    %v518 = vpack.c.b16 %v442, %v441
    %v519 = vpack.c.b16 %v444, %v443
    %v520 = vpack.c.b16 %v446, %v445
    %v521 = vpack.c.b16 %v448, %v447
    %v522 = vpack.c.b16 %v450, %v449
    %v523 = vpack.c.b16 %v452, %v451
    %v524 = vpack.c.b16 %v454, %v453
    %v525 = vpack.c.b16 %v456, %v455
    %v526 = vpack.c.b16 %v458, %v457
    %v527 = vpack.c.b16 %v460, %v459
    %v528 = vpack.c.b16 %v462, %v461
    %v529 = vpack.c.b16 %v464, %v463
    %v530 = vpack.c.b16 %v466, %v465
    %595 = vmatprep.subr.bf16.mxu0 0
    %596 = vmatpush1.bf16.msra.mxu0 %v474
    %597 = vmatprep.subr.bf16.mxu0 0
    %598 = vmatpush1.bf16.msra.mxu0 %v473
    %599 = vmatprep.subr.bf16.mxu0 0
    %600 = vmatpush1.bf16.msra.mxu0 %v472
    %601 = vmatprep.subr.bf16.mxu0 0
    %602 = vmatpush1.bf16.msra.mxu0 %v471
    %603 = vmatprep.subr.bf16.mxu0 0
    %604 = vmatpush1.bf16.msra.mxu0 %v470
    %605 = vmatprep.subr.bf16.mxu0 0
    %606 = vmatpush1.bf16.msra.mxu0 %v469
    %607 = vmatprep.subr.bf16.mxu0 0
    %608 = vmatpush1.bf16.msra.mxu0 %v468
    %609 = vmatprep.subr.bf16.mxu0 0
    %610 = vmatpush1.bf16.msra.mxu0 %v467
    %611 = vmatprep.subr.bf16.mxu0 0
    %612 = vmatpush2.bf16.msra.mxu0 %v482
    %613 = vmatprep.subr.bf16.mxu0 0
    %614 = vmatpush2.bf16.msra.mxu0 %v481
    %615 = vmatprep.subr.bf16.mxu0 0
    %616 = vmatpush2.bf16.msra.mxu0 %v480
    %617 = vmatprep.subr.bf16.mxu0 0
    %618 = vmatpush2.bf16.msra.mxu0 %v479
    %619 = vmatprep.subr.bf16.mxu0 0
    %620 = vmatpush2.bf16.msra.mxu0 %v478
    %621 = vmatprep.subr.bf16.mxu0 0
    %622 = vmatpush2.bf16.msra.mxu0 %v477
    %623 = vmatprep.subr.bf16.mxu0 0
    %624 = vmatpush2.bf16.msra.mxu0 %v476
    %625 = vmatprep.subr.bf16.mxu0 0
    %626 = vmatpush2.bf16.msra.mxu0 %v475
    %627 = vmatprep.mubr.bf16.mxu0 %v69
    %628 = vmatmul.mubr.bf16.gmra.mxu0 %v68
    %v629 = vpop.f32.mrf.mxu0
    %v630 = vadd.f32 %v209, %v629
    %v631 = vpop.f32.mrf.mxu0
    %v632 = vpop.f32.mrf.mxu0
    %v633 = vpop.f32.mrf.mxu0
    %634 = vdwg.mxu0
    %635 = vmatprep.subr.bf16.mxu0 0
    %636 = vmatpush1.bf16.msra.mxu0 %v490
    %637 = vmatprep.subr.bf16.mxu0 0
    %638 = vmatpush1.bf16.msra.mxu0 %v489
    %639 = vmatprep.subr.bf16.mxu0 0
    %640 = vmatpush1.bf16.msra.mxu0 %v488
    %641 = vmatprep.subr.bf16.mxu0 0
    %642 = vmatpush1.bf16.msra.mxu0 %v487
    %643 = vmatprep.subr.bf16.mxu0 0
    %644 = vmatpush1.bf16.msra.mxu0 %v486
    %645 = vmatprep.subr.bf16.mxu0 0
    %646 = vmatpush1.bf16.msra.mxu0 %v485
    %647 = vmatprep.subr.bf16.mxu0 0
    %648 = vmatpush1.bf16.msra.mxu0 %v484
    %649 = vmatprep.subr.bf16.mxu0 0
    %650 = vmatpush1.bf16.msra.mxu0 %v483
    %651 = vmatprep.subr.bf16.mxu0 0
    %652 = vmatpush2.bf16.msra.mxu0 %v498
    %653 = vmatprep.subr.bf16.mxu0 0
    %654 = vmatpush2.bf16.msra.mxu0 %v497
    %655 = vmatprep.subr.bf16.mxu0 0
    %656 = vmatpush2.bf16.msra.mxu0 %v496
    %657 = vmatprep.subr.bf16.mxu0 0
    %658 = vmatpush2.bf16.msra.mxu0 %v495
    %659 = vmatprep.subr.bf16.mxu0 0
    %660 = vmatpush2.bf16.msra.mxu0 %v494
    %661 = vmatprep.subr.bf16.mxu0 0
    %662 = vmatpush2.bf16.msra.mxu0 %v493
    %663 = vmatprep.subr.bf16.mxu0 0
    %664 = vmatpush2.bf16.msra.mxu0 %v492
    %665 = vmatprep.subr.bf16.mxu0 0
    %666 = vmatpush2.bf16.msra.mxu0 %v491
    %667 = vmatprep.mubr.bf16.mxu0 %v71
    %668 = vmatmul.mubr.bf16.gmra.mxu0 %v70
    %v669 = vpop.f32.mrf.mxu0
    %v670 = vadd.f32 %v630, %v669
    %v671 = vpop.f32.mrf.mxu0
    %v672 = vpop.f32.mrf.mxu0
    %v673 = vpop.f32.mrf.mxu0
    %674 = vdwg.mxu0
    %675 = vmatprep.subr.bf16.mxu0 0
    %676 = vmatpush1.bf16.msra.mxu0 %v506
    %677 = vmatprep.subr.bf16.mxu0 0
    %678 = vmatpush1.bf16.msra.mxu0 %v505
    %679 = vmatprep.subr.bf16.mxu0 0
    %680 = vmatpush1.bf16.msra.mxu0 %v504
    %681 = vmatprep.subr.bf16.mxu0 0
    %682 = vmatpush1.bf16.msra.mxu0 %v503
    %683 = vmatprep.subr.bf16.mxu0 0
    %684 = vmatpush1.bf16.msra.mxu0 %v502
    %685 = vmatprep.subr.bf16.mxu0 0
    %686 = vmatpush1.bf16.msra.mxu0 %v501
    %687 = vmatprep.subr.bf16.mxu0 0
    %688 = vmatpush1.bf16.msra.mxu0 %v500
    %689 = vmatprep.subr.bf16.mxu0 0
    %690 = vmatpush1.bf16.msra.mxu0 %v499
    %691 = vmatprep.subr.bf16.mxu0 0
    %692 = vmatpush2.bf16.msra.mxu0 %v514
    %693 = vmatprep.subr.bf16.mxu0 0
    %694 = vmatpush2.bf16.msra.mxu0 %v513
    %695 = vmatprep.subr.bf16.mxu0 0
    %696 = vmatpush2.bf16.msra.mxu0 %v512
    %697 = vmatprep.subr.bf16.mxu0 0
    %698 = vmatpush2.bf16.msra.mxu0 %v511
    %699 = vmatprep.subr.bf16.mxu0 0
    %700 = vmatpush2.bf16.msra.mxu0 %v510
    %701 = vmatprep.subr.bf16.mxu0 0
    %702 = vmatpush2.bf16.msra.mxu0 %v509
    %703 = vmatprep.subr.bf16.mxu0 0
    %704 = vmatpush2.bf16.msra.mxu0 %v508
    %705 = vmatprep.subr.bf16.mxu0 0
    %706 = vmatpush2.bf16.msra.mxu0 %v507
    %707 = vmatprep.mubr.bf16.mxu0 %v73
    %708 = vmatmul.mubr.bf16.gmra.mxu0 %v72
    %v709 = vpop.f32.mrf.mxu0
    %v710 = vadd.f32 %v670, %v709
    %v711 = vpop.f32.mrf.mxu0
    %v712 = vpop.f32.mrf.mxu0
    %v713 = vpop.f32.mrf.mxu0
    %714 = vdwg.mxu0
    %715 = vmatprep.subr.bf16.mxu0 0
    %716 = vmatpush1.bf16.msra.mxu0 %v522
    %717 = vmatprep.subr.bf16.mxu0 0
    %718 = vmatpush1.bf16.msra.mxu0 %v521
    %719 = vmatprep.subr.bf16.mxu0 0
    %720 = vmatpush1.bf16.msra.mxu0 %v520
    %721 = vmatprep.subr.bf16.mxu0 0
    %722 = vmatpush1.bf16.msra.mxu0 %v519
    %723 = vmatprep.subr.bf16.mxu0 0
    %724 = vmatpush1.bf16.msra.mxu0 %v518
    %725 = vmatprep.subr.bf16.mxu0 0
    %726 = vmatpush1.bf16.msra.mxu0 %v517
    %727 = vmatprep.subr.bf16.mxu0 0
    %728 = vmatpush1.bf16.msra.mxu0 %v516
    %729 = vmatprep.subr.bf16.mxu0 0
    %730 = vmatpush1.bf16.msra.mxu0 %v515
    %731 = vmatprep.subr.bf16.mxu0 0
    %732 = vmatpush2.bf16.msra.mxu0 %v530
    %733 = vmatprep.subr.bf16.mxu0 0
    %734 = vmatpush2.bf16.msra.mxu0 %v529
    %735 = vmatprep.subr.bf16.mxu0 0
    %736 = vmatpush2.bf16.msra.mxu0 %v528
    %737 = vmatprep.subr.bf16.mxu0 0
    %738 = vmatpush2.bf16.msra.mxu0 %v527
    %739 = vmatprep.subr.bf16.mxu0 0
    %740 = vmatpush2.bf16.msra.mxu0 %v526
    %741 = vmatprep.subr.bf16.mxu0 0
    %742 = vmatpush2.bf16.msra.mxu0 %v525
    %743 = vmatprep.subr.bf16.mxu0 0
    %744 = vmatpush2.bf16.msra.mxu0 %v524
    %745 = vmatprep.subr.bf16.mxu0 0
    %746 = vmatpush2.bf16.msra.mxu0 %v523
    %747 = vmatprep.mubr.bf16.mxu0 %v75
    %748 = vmatmul.mubr.bf16.gmra.mxu0 %v74
    %v749 = vpop.f32.mrf.mxu0
    %v750 = vadd.f32 %v710, %v749
    %v751 = vpop.f32.mrf.mxu0
    %v752 = vpop.f32.mrf.mxu0
    %v753 = vpop.f32.mrf.mxu0
    %754 = vdwg.mxu0
    %v755 = vmax.f32 %v750, 0.0
    %v756 = vpack.c.bf16 %v755, %v755
    %v757 = vld [vmem:[%s3] sm:$0xf]
    %v758 = vld [vmem:[%s3 + $0x4] sm:$0xf]
    %v759 = vld [vmem:[%s3 + $0x8] sm:$0xf]
    %v760 = vld [vmem:[%s3 + $0xc] sm:$0xf]
    %v761 = vld [vmem:[%s4] sm:$0x1]
    %v763 = vlaneseq
    %v764 = vshrl.u32 %v763, 7
    %v765 = vsub.s32 0, %v764
    %v766 = vrot.slane %v761, %v765
    %v772 = vunpack.c.l.b16 %v757
    %v773 = vunpack.c.l.b16 %v758
    %v774 = vunpack.c.l.b16 %v759
    %v775 = vunpack.c.l.b16 %v760
    %v776 = vpack.c.b16 %v773, %v772
    %v777 = vpack.c.b16 %v775, %v774
    %vm780 = vcmask 261120
    %v782 = vsel %vm780, %v756, 0
    %784 = vmatprep.subr.bf16.mxu0 0
    %785 = vmatpush1.bf16.msra.mxu0 0
    %786 = vmatprep.subr.bf16.mxu0 0
    %787 = vmatpush1.bf16.msra.mxu0 0
    %788 = vmatprep.subr.bf16.mxu0 0
    %789 = vmatpush1.bf16.msra.mxu0 0
    %790 = vmatprep.subr.bf16.mxu0 0
    %791 = vmatpush1.bf16.msra.mxu0 0
    %792 = vmatprep.subr.bf16.mxu0 0
    %793 = vmatpush1.bf16.msra.mxu0 0
    %794 = vmatprep.subr.bf16.mxu0 0
    %795 = vmatpush1.bf16.msra.mxu0 0
    %796 = vmatprep.subr.bf16.mxu0 0
    %797 = vmatpush1.bf16.msra.mxu0 %v777
    %798 = vmatprep.subr.bf16.mxu0 0
    %799 = vmatpush1.bf16.msra.mxu0 %v776
    %800 = vmatprep.subr.bf16.mxu0 0
    %801 = vmatpush2.bf16.msra.mxu0 0
    %802 = vmatprep.subr.bf16.mxu0 0
    %803 = vmatpush2.bf16.msra.mxu0 0
    %804 = vmatprep.subr.bf16.mxu0 0
    %805 = vmatpush2.bf16.msra.mxu0 0
    %806 = vmatprep.subr.bf16.mxu0 0
    %807 = vmatpush2.bf16.msra.mxu0 0
    %808 = vmatprep.subr.bf16.mxu0 0
    %809 = vmatpush2.bf16.msra.mxu0 0
    %810 = vmatprep.subr.bf16.mxu0 0
    %811 = vmatpush2.bf16.msra.mxu0 0
    %812 = vmatprep.subr.bf16.mxu0 0
    %813 = vmatpush2.bf16.msra.mxu0 0
    %814 = vmatprep.subr.bf16.mxu0 0
    %815 = vmatpush2.bf16.msra.mxu0 0
    %816 = vmatprep.mubr.bf16.mxu0 0
    %817 = vmatmul.mubr.bf16.gmra.mxu0 %v782
    %v818 = vpop.f32.mrf.mxu0
    %v819 = vadd.f32 %v766, %v818
    %v820 = vpop.f32.mrf.mxu0
    %v821 = vpop.f32.mrf.mxu0
    %v822 = vpop.f32.mrf.mxu0
    %823 = vdwg.mxu0
    %824 = vst [vmem:[#allocation2] sm:$0x3] %v819
    // Predicated region
    $region22: #{tpu_custom_call.1} parent=1 // pred_check
      _
    $region23: #{tpu_custom_call.1} parent=1 // pred_check_branch
      %826 = sbr.rel (0) target = $region25
    $region24: #{tpu_custom_call.1} parent=1 // pred_region
      %s828 = ssub.s32 32, 32
      %829 = vsyncadd [#allocation3], %s828
      %s831 = sshll.u32 [#allocation2], 4
      %s832 = int_to_ptr.vmem [resolvable:$true] %s831
      %834 = dma.vmem_to_hbm [thread:$0]  %s832, 32, %s5, [#allocation3]
    $region25: #{tpu_custom_call.1} parent=1 // pred_fallthru
      _
    // Predicated region
    $region26: #{tpu_custom_call.1} parent=1 // pred_check
      _
    $region27: #{tpu_custom_call.1} parent=1 // pred_check_branch
      %836 = sbr.rel (0) target = $region29
    $region28: #{tpu_custom_call.1} parent=1 // pred_region
      %837 = dma.done [#allocation3], 32
    $region29: #{tpu_custom_call.1} parent=1 // pred_fallthru
      _
    %838 = vsyncpa [#allocation3], 1

</llo_original>
